<compile_context>
chip_gen: v7x
topology: tpu7x:2x2x1
jax: 0.10.0
libtpu: 0.0.40
codegen_flags: <defaults>
</compile_context>

<pallas_src>
import jax
import jax.numpy as jnp
from jax.experimental import pallas as pl
from jax.experimental.pallas import tpu as pltpu


def mlp_kernel(x_ref, w1_ref, b1_ref, w2_ref, b2_ref, w3_ref, b3_ref, o_ref):
    # fc1 + ReLU: MXU dot with f32 accumulation, f32 VPU epilogue.
    h1 = jnp.dot(x_ref[...], w1_ref[...], preferred_element_type=jnp.float32)
    h1 = jnp.maximum(h1 + b1_ref[...], 0.0)
    # fc2 + ReLU. Cast activations back to the weight dtype so bf16 weights
    # keep layers 2/3 on the bf16 MXU path (no-op when weights are f32).
    h2 = jnp.dot(h1.astype(w2_ref.dtype), w2_ref[...],
                 preferred_element_type=jnp.float32)
    h2 = jnp.maximum(h2 + b2_ref[...], 0.0)
    # fc3 (no activation). Output block last dim == true out_dim (2): a small
    # masked partial store in VMEM, but no 64x HBM write amplification.
    out = jnp.dot(h2.astype(w3_ref.dtype), w3_ref[...],
                  preferred_element_type=jnp.float32)
    o_ref[...] = (out + b3_ref[...]).astype(o_ref.dtype)


def _pick_block_b(batch, max_block=1024, min_steps=4):
    """Largest batch tile <= max_block that still leaves >= min_steps grid steps.

    >=2 steps is required for v7x's two TensorCores to split the 'parallel'
    batch axis and for double-buffering to overlap DMA with compute; >=4 gives
    headroom.  The tile is rounded up to a multiple of 8 (sublane constraint).
    """
    per_step = pl.cdiv(batch, min_steps)
    per_step = ((per_step + 7) // 8) * 8
    return max(8, min(max_block, per_step))


def mlp_forward(x, w1, b1, w2, b2, w3, b3, *, block_b=None, compute_dtype=None):
    B, in_dim = x.shape
    out_dim = w3.shape[1]

    if compute_dtype is not None:
        # bf16 activations/weights with f32 accumulation (biases stay f32 and
        # are added in the f32 epilogue).
        x = x.astype(compute_dtype)
        w1 = w1.astype(compute_dtype)
        w2 = w2.astype(compute_dtype)
        w3 = w3.astype(compute_dtype)

    if block_b is None:
        block_b = _pick_block_b(B)

    grid = (pl.cdiv(B, block_b),)

    # Weights/biases: full-array blocks with a constant block index -> DMA'd
    # exactly once and resident in VMEM across all grid iterations.
    def resident(a):
        nd = a.ndim
        return pl.BlockSpec(a.shape, lambda i: (0,) * nd)

    return pl.pallas_call(
        mlp_kernel,
        out_shape=jax.ShapeDtypeStruct((B, out_dim), jnp.float32),
        grid_spec=pl.GridSpec(
            grid=grid,
            in_specs=[
                # x tiled over batch; last dim (10) equals the full array dim.
                pl.BlockSpec((block_b, in_dim), lambda i: (i, 0)),
                resident(w1), resident(b1),
                resident(w2), resident(b2),
                resident(w3), resident(b3),
            ],
            # Output last dim is the true out_dim (== full array dim): no pad,
            # no wrapper-side slice, minimal HBM writeback.
            out_specs=pl.BlockSpec((block_b, out_dim), lambda i: (i, 0)),
        ),
        compiler_params=pltpu.CompilerParams(
            # Independent batch tiles -> shard across both TCs on v7x;
            # harmless on single-TC v5e/v6e.
            dimension_semantics=("parallel",),
        ),
    )(x, w1, b1, w2, b2, w3, b3)


def init_params(key, in_dim, h1, h2, out_dim):
    # Deterministic init mimicking nn.Linear's U(-1/sqrt(fan_in), 1/sqrt(fan_in)),
    # with weights stored as (in_features, out_features).
    ks = jax.random.split(key, 6)

    def linear(kw, kb, fan_in, fan_out):
        bound = 1.0 / jnp.sqrt(fan_in)
        w = jax.random.uniform(kw, (fan_in, fan_out), jnp.float32, -bound, bound)
        b = jax.random.uniform(kb, (1, fan_out), jnp.float32, -bound, bound)
        return w, b

    w1, b1 = linear(ks[0], ks[1], in_dim, h1)
    w2, b2 = linear(ks[2], ks[3], h1, h2)
    w3, b3 = linear(ks[4], ks[5], h2, out_dim)
    return w1, b1, w2, b2, w3, b3


if __name__ == "__main__":
    key = jax.random.PRNGKey(0)
    k_x, k_p = jax.random.split(key)

    # Small demo shapes consistent with the module: 10 -> 32 -> 32 -> 2.
    # B=256 with the auto-picked tile (64 rows) exercises a 4-step batch grid.
    B, IN, H1, H2, OUT = 256, 10, 32, 32, 2
    x = jax.random.normal(k_x, (B, IN), jnp.float32)
    params = init_params(k_p, IN, H1, H2, OUT)

    # f32 path: exact reference check.
    out = jax.block_until_ready(mlp_forward(x, *params))

    w1, b1, w2, b2, w3, b3 = params
    ref = jnp.maximum(x @ w1 + b1, 0.0)
    ref = jnp.maximum(ref @ w2 + b2, 0.0)
    ref = ref @ w3 + b3
    assert out.shape == (B, OUT)
    assert jnp.allclose(out, ref, atol=1e-4, rtol=1e-4)

    # bf16-activation path (bandwidth win on v6e/v7x): f32 accumulation, so
    # results stay close; checked with a loose tolerance.
    out_bf16 = jax.block_until_ready(
        mlp_forward(x, *params, compute_dtype=jnp.bfloat16))
    assert out_bf16.shape == (B, OUT)
    assert jnp.allclose(out_bf16, ref, atol=1e-1, rtol=1e-1)

    print("KERNEL_OK")
</pallas_src>

<mosaic_0001>
module attributes {stable_mosaic.version = 11 : i64} {
  func.func @mlp_kernel(%arg0: i32, %arg1: memref<64x10xf32, #tpu.memory_space<vmem>>, %arg2: memref<10x32xf32, #tpu.memory_space<vmem>>, %arg3: memref<1x32xf32, #tpu.memory_space<vmem>>, %arg4: memref<32x32xf32, #tpu.memory_space<vmem>>, %arg5: memref<1x32xf32, #tpu.memory_space<vmem>>, %arg6: memref<32x2xf32, #tpu.memory_space<vmem>>, %arg7: memref<1x2xf32, #tpu.memory_space<vmem>>, %arg8: memref<64x2xf32, #tpu.memory_space<vmem>>) attributes {dimension_semantics = [#tpu.dimension_semantics<parallel>], iteration_bounds = array<i64: 4>, scalar_prefetch = 0 : i64, scratch_operands = 0 : i64, tpu.core_type = #tpu.core_type<tc>, window_params = [{transform_indices = @transform_0, window_bounds = array<i64: 64, 10>}, {pipeline_mode = #tpu.pipeline_mode<synchronous>, transform_indices = @transform_1, window_bounds = array<i64: 10, 32>}, {pipeline_mode = #tpu.pipeline_mode<synchronous>, transform_indices = @transform_2, window_bounds = array<i64: 1, 32>}, {pipeline_mode = #tpu.pipeline_mode<synchronous>, transform_indices = @transform_3, window_bounds = array<i64: 32, 32>}, {pipeline_mode = #tpu.pipeline_mode<synchronous>, transform_indices = @transform_4, window_bounds = array<i64: 1, 32>}, {pipeline_mode = #tpu.pipeline_mode<synchronous>, transform_indices = @transform_5, window_bounds = array<i64: 32, 2>}, {pipeline_mode = #tpu.pipeline_mode<synchronous>, transform_indices = @transform_6, window_bounds = array<i64: 1, 2>}, {transform_indices = @transform_7, window_bounds = array<i64: 64, 2>}]} {
    %c0 = arith.constant 0 : index
    %c0_0 = arith.constant 0 : index
    %0 = vector.load %arg1[%c0, %c0_0] : memref<64x10xf32, #tpu.memory_space<vmem>>, vector<64x10xf32>
    %c0_1 = arith.constant 0 : index
    %c0_2 = arith.constant 0 : index
    %1 = vector.load %arg2[%c0_1, %c0_2] : memref<10x32xf32, #tpu.memory_space<vmem>>, vector<10x32xf32>
    %cst = arith.constant dense<0.000000e+00> : vector<64x32xf32>
    %2 = tpu.matmul %0, %1, %cst {dimension_numbers = #tpu.dot_dimension_numbers<[1], [0], [0], [1], [0, 0, 1, 1], [], []>} : vector<64x10xf32>, vector<10x32xf32>, vector<64x32xf32> -> vector<64x32xf32>
    %c0_3 = arith.constant 0 : index
    %c0_4 = arith.constant 0 : index
    %3 = vector.load %arg3[%c0_3, %c0_4] : memref<1x32xf32, #tpu.memory_space<vmem>>, vector<1x32xf32>
    %4 = vector.broadcast %3 : vector<1x32xf32> to vector<64x32xf32>
    %5 = arith.addf %2, %4 : vector<64x32xf32>
    %cst_5 = arith.constant 0.000000e+00 : f32
    %6 = vector.broadcast %cst_5 : f32 to vector<64x32xf32>
    %7 = arith.maximumf %5, %6 : vector<64x32xf32>
    %c0_6 = arith.constant 0 : index
    %c0_7 = arith.constant 0 : index
    %8 = vector.load %arg4[%c0_6, %c0_7] : memref<32x32xf32, #tpu.memory_space<vmem>>, vector<32x32xf32>
    %cst_8 = arith.constant dense<0.000000e+00> : vector<64x32xf32>
    %9 = tpu.matmul %7, %8, %cst_8 {dimension_numbers = #tpu.dot_dimension_numbers<[1], [0], [0], [1], [0, 0, 1, 1], [], []>} : vector<64x32xf32>, vector<32x32xf32>, vector<64x32xf32> -> vector<64x32xf32>
    %c0_9 = arith.constant 0 : index
    %c0_10 = arith.constant 0 : index
    %10 = vector.load %arg5[%c0_9, %c0_10] : memref<1x32xf32, #tpu.memory_space<vmem>>, vector<1x32xf32>
    %11 = vector.broadcast %10 : vector<1x32xf32> to vector<64x32xf32>
    %12 = arith.addf %9, %11 : vector<64x32xf32>
    %cst_11 = arith.constant 0.000000e+00 : f32
    %13 = vector.broadcast %cst_11 : f32 to vector<64x32xf32>
    %14 = arith.maximumf %12, %13 : vector<64x32xf32>
    %c0_12 = arith.constant 0 : index
    %c0_13 = arith.constant 0 : index
    %15 = vector.load %arg6[%c0_12, %c0_13] : memref<32x2xf32, #tpu.memory_space<vmem>>, vector<32x2xf32>
    %cst_14 = arith.constant dense<0.000000e+00> : vector<64x2xf32>
    %16 = tpu.matmul %14, %15, %cst_14 {dimension_numbers = #tpu.dot_dimension_numbers<[1], [0], [0], [1], [0, 0, 1, 1], [], []>} : vector<64x32xf32>, vector<32x2xf32>, vector<64x2xf32> -> vector<64x2xf32>
    %c0_15 = arith.constant 0 : index
    %c0_16 = arith.constant 0 : index
    %17 = vector.load %arg7[%c0_15, %c0_16] : memref<1x2xf32, #tpu.memory_space<vmem>>, vector<1x2xf32>
    %18 = vector.broadcast %17 : vector<1x2xf32> to vector<64x2xf32>
    %19 = arith.addf %16, %18 : vector<64x2xf32>
    %c0_17 = arith.constant 0 : index
    %c0_18 = arith.constant 0 : index
    %20 = vector.load %arg8[%c0_17, %c0_18] : memref<64x2xf32, #tpu.memory_space<vmem>>, vector<64x2xf32>
    tpu.vector_store %arg8[%c0_17, %c0_18], %19 {strides = array<i32>} : memref<64x2xf32, #tpu.memory_space<vmem>>, vector<64x2xf32>,
    return
  }
  func.func @transform_0(%arg0: i32) -> (i32, i32) {
    %c0_i32 = arith.constant 0 : i32
    %c0_i32_0 = arith.constant 0 : i32
    return %arg0, %c0_i32 : i32, i32
  }
  func.func @transform_1(%arg0: i32) -> (i32, i32) {
    %c0_i32 = arith.constant 0 : i32
    %c0_i32_0 = arith.constant 0 : i32
    %c0_i32_1 = arith.constant 0 : i32
    return %c0_i32, %c0_i32_0 : i32, i32
  }
  func.func @transform_2(%arg0: i32) -> (i32, i32) {
    %c0_i32 = arith.constant 0 : i32
    %c0_i32_0 = arith.constant 0 : i32
    %c0_i32_1 = arith.constant 0 : i32
    return %c0_i32, %c0_i32_0 : i32, i32
  }
  func.func @transform_3(%arg0: i32) -> (i32, i32) {
    %c0_i32 = arith.constant 0 : i32
    %c0_i32_0 = arith.constant 0 : i32
    %c0_i32_1 = arith.constant 0 : i32
    return %c0_i32, %c0_i32_0 : i32, i32
  }
  func.func @transform_4(%arg0: i32) -> (i32, i32) {
    %c0_i32 = arith.constant 0 : i32
    %c0_i32_0 = arith.constant 0 : i32
    %c0_i32_1 = arith.constant 0 : i32
    return %c0_i32, %c0_i32_0 : i32, i32
  }
  func.func @transform_5(%arg0: i32) -> (i32, i32) {
    %c0_i32 = arith.constant 0 : i32
    %c0_i32_0 = arith.constant 0 : i32
    %c0_i32_1 = arith.constant 0 : i32
    return %c0_i32, %c0_i32_0 : i32, i32
  }
  func.func @transform_6(%arg0: i32) -> (i32, i32) {
    %c0_i32 = arith.constant 0 : i32
    %c0_i32_0 = arith.constant 0 : i32
    %c0_i32_1 = arith.constant 0 : i32
    return %c0_i32, %c0_i32_0 : i32, i32
  }
  func.func @transform_7(%arg0: i32) -> (i32, i32) {
    %c0_i32 = arith.constant 0 : i32
    %c0_i32_0 = arith.constant 0 : i32
    return %arg0, %c0_i32 : i32, i32
  }
}

</mosaic_0001>

<llo_original>
// kernel: tpu_custom_call.1
$region0: #{tpu_custom_call.1}
  #allocation0 [shape = 'u32[]', space=smem, size = 0x4, offset = 0x4, fixed_abs, tag = 'smem constant byte address 0x4 - core index']
  #allocation1 [shape = 'u32[144,128]{1,0:T(1,128)}', space=vmem, size = 0x12000, scoped, tag = 'internal scratch']
  %s0 = inlined_call_operand.vmem [shape: f32[256,10], index: 0, kind: input, shape index: {}]
  %s1 = inlined_call_operand.vmem [shape: f32[10,32], index: 1, kind: input, shape index: {}]
  %s2 = inlined_call_operand.vmem [shape: f32[1,32], index: 2, kind: input, shape index: {}]
  %s3 = inlined_call_operand.vmem [shape: f32[32,32], index: 3, kind: input, shape index: {}]
  %s4 = inlined_call_operand.vmem [shape: f32[1,32], index: 4, kind: input, shape index: {}]
  %s5 = inlined_call_operand.vmem [shape: f32[32,2], index: 5, kind: input, shape index: {}]
  %s6 = inlined_call_operand.vmem [shape: f32[1,2], index: 6, kind: input, shape index: {}]
  %s7 = inlined_call_operand.vmem [shape: f32[256,2], index: 7, kind: output, shape index: {}]
  %s8 = sld [smem:[#allocation0]]
  $region61: #{tpu_custom_call.1} parent=0
    _
  %s10 = ssub.s32 1, %s8
  %s11 = scalar_select 0, %s10, %s8
  loop: start=0, step=1, limit=6
  $region2: #{tpu_custom_call.1} parent=0 // loop_pre_header
    _
  $region3: #{tpu_custom_call.1} parent=0 // loop_header
    %s13 = sphi 0, %s17
    %p14 = scmp.ge.s32.totalorder %s13, 6
    %s23 = sphi 0, %s25
    %s26 = sphi 0, %s23
    %s27 = sphi 0, %s26
    %s43 = sphi 0, %s27
    %s47 = sphi 0, %s47
    %s49 = sphi 0, %s47
    %s50 = sphi 0, %s49
    %s64 = sphi 0, %s50
    %s68 = sphi 0, %s68
    %s70 = sphi 0, %s68
    %s71 = sphi 0, %s70
    %s85 = sphi 0, %s71
    %s89 = sphi 0, %s89
    %s91 = sphi 0, %s89
    %s92 = sphi 0, %s91
    %s106 = sphi 0, %s92
    %s110 = sphi 0, %s110
    %s112 = sphi 0, %s110
    %s113 = sphi 0, %s112
    %s127 = sphi 0, %s113
    %s131 = sphi 0, %s131
    %s133 = sphi 0, %s131
    %s134 = sphi 0, %s133
    %s148 = sphi 0, %s134
    %s152 = sphi 0, %s152
    %s154 = sphi 0, %s152
    %s155 = sphi 0, %s154
    %s169 = sphi 0, %s155
    %s175 = sphi 0, %s177
    %s178 = sphi 0, %s175
    %s179 = sphi 0, %s178
    %s195 = sphi 0, %s179
  $region4: #{tpu_custom_call.1} parent=0 // loop_header_branch
    %16 = sbr.rel (%p14) target = $region8
  $region5: #{tpu_custom_call.1} parent=0 // loop_body
    %s18 = ssub.s32 %s13, 1
    %s19 = ssub.s32 %s13, 2
    %s20 = sadd.s32 %s13, 1
    %s21 = ssub.s32 %s13, %s20
    %p22 = scmp.eq.s32.totalorder %s21, 0
    %s24 = sadd.s32 %s23, 1
    %s25 = scalar_select %p22, %s23, %s24
    %p28 = pneg %p22
    %p29 = scmp.eq.s32.totalorder %s13, 3
    %p30 = por %p28, %p29
    %p31 = scmp.ne.s32.totalorder %s23, %s26
    %p32 = scmp.eq.s32.totalorder %s13, 0
    %p33 = por %p31, %p32
    %p34 = scmp.ne.s32.totalorder %s23, %s26
    %p35 = scmp.eq.s32.totalorder %s18, 3
    %p36 = por %p34, %p35
    %p37 = scmp.ne.s32.totalorder %s26, %s27
    %p38 = scmp.eq.s32.totalorder %s18, 0
    %p39 = por %p37, %p38
    %p40 = scmp.ne.s32.totalorder %s26, %s27
    %p41 = scmp.eq.s32.totalorder %s19, 3
    %p42 = por %p40, %p41
    %p44 = scmp.ne.s32.totalorder %s27, %s43
    %p45 = scmp.eq.s32.totalorder %s19, 0
    %p46 = por %p44, %p45
    %s48 = sadd.s32 %s47, 1
    %p51 = scmp.eq.s32.totalorder %s13, 3
    %p52 = scmp.ne.s32.totalorder %s47, %s49
    %p53 = scmp.eq.s32.totalorder %s13, 0
    %p54 = por %p52, %p53
    %p55 = scmp.ne.s32.totalorder %s47, %s49
    %p56 = scmp.eq.s32.totalorder %s18, 3
    %p57 = por %p55, %p56
    %p58 = scmp.ne.s32.totalorder %s49, %s50
    %p59 = scmp.eq.s32.totalorder %s18, 0
    %p60 = por %p58, %p59
    %p61 = scmp.ne.s32.totalorder %s49, %s50
    %p62 = scmp.eq.s32.totalorder %s19, 3
    %p63 = por %p61, %p62
    %p65 = scmp.ne.s32.totalorder %s50, %s64
    %p66 = scmp.eq.s32.totalorder %s19, 0
    %p67 = por %p65, %p66
    %s69 = sadd.s32 %s68, 1
    %p72 = scmp.eq.s32.totalorder %s13, 3
    %p73 = scmp.ne.s32.totalorder %s68, %s70
    %p74 = scmp.eq.s32.totalorder %s13, 0
    %p75 = por %p73, %p74
    %p76 = scmp.ne.s32.totalorder %s68, %s70
    %p77 = scmp.eq.s32.totalorder %s18, 3
    %p78 = por %p76, %p77
    %p79 = scmp.ne.s32.totalorder %s70, %s71
    %p80 = scmp.eq.s32.totalorder %s18, 0
    %p81 = por %p79, %p80
    %p82 = scmp.ne.s32.totalorder %s70, %s71
    %p83 = scmp.eq.s32.totalorder %s19, 3
    %p84 = por %p82, %p83
    %p86 = scmp.ne.s32.totalorder %s71, %s85
    %p87 = scmp.eq.s32.totalorder %s19, 0
    %p88 = por %p86, %p87
    %s90 = sadd.s32 %s89, 1
    %p93 = scmp.eq.s32.totalorder %s13, 3
    %p94 = scmp.ne.s32.totalorder %s89, %s91
    %p95 = scmp.eq.s32.totalorder %s13, 0
    %p96 = por %p94, %p95
    %p97 = scmp.ne.s32.totalorder %s89, %s91
    %p98 = scmp.eq.s32.totalorder %s18, 3
    %p99 = por %p97, %p98
    %p100 = scmp.ne.s32.totalorder %s91, %s92
    %p101 = scmp.eq.s32.totalorder %s18, 0
    %p102 = por %p100, %p101
    %p103 = scmp.ne.s32.totalorder %s91, %s92
    %p104 = scmp.eq.s32.totalorder %s19, 3
    %p105 = por %p103, %p104
    %p107 = scmp.ne.s32.totalorder %s92, %s106
    %p108 = scmp.eq.s32.totalorder %s19, 0
    %p109 = por %p107, %p108
    %s111 = sadd.s32 %s110, 1
    %p114 = scmp.eq.s32.totalorder %s13, 3
    %p115 = scmp.ne.s32.totalorder %s110, %s112
    %p116 = scmp.eq.s32.totalorder %s13, 0
    %p117 = por %p115, %p116
    %p118 = scmp.ne.s32.totalorder %s110, %s112
    %p119 = scmp.eq.s32.totalorder %s18, 3
    %p120 = por %p118, %p119
    %p121 = scmp.ne.s32.totalorder %s112, %s113
    %p122 = scmp.eq.s32.totalorder %s18, 0
    %p123 = por %p121, %p122
    %p124 = scmp.ne.s32.totalorder %s112, %s113
    %p125 = scmp.eq.s32.totalorder %s19, 3
    %p126 = por %p124, %p125
    %p128 = scmp.ne.s32.totalorder %s113, %s127
    %p129 = scmp.eq.s32.totalorder %s19, 0
    %p130 = por %p128, %p129
    %s132 = sadd.s32 %s131, 1
    %p135 = scmp.eq.s32.totalorder %s13, 3
    %p136 = scmp.ne.s32.totalorder %s131, %s133
    %p137 = scmp.eq.s32.totalorder %s13, 0
    %p138 = por %p136, %p137
    %p139 = scmp.ne.s32.totalorder %s131, %s133
    %p140 = scmp.eq.s32.totalorder %s18, 3
    %p141 = por %p139, %p140
    %p142 = scmp.ne.s32.totalorder %s133, %s134
    %p143 = scmp.eq.s32.totalorder %s18, 0
    %p144 = por %p142, %p143
    %p145 = scmp.ne.s32.totalorder %s133, %s134
    %p146 = scmp.eq.s32.totalorder %s19, 3
    %p147 = por %p145, %p146
    %p149 = scmp.ne.s32.totalorder %s134, %s148
    %p150 = scmp.eq.s32.totalorder %s19, 0
    %p151 = por %p149, %p150
    %s153 = sadd.s32 %s152, 1
    %p156 = scmp.eq.s32.totalorder %s13, 3
    %p157 = scmp.ne.s32.totalorder %s152, %s154
    %p158 = scmp.eq.s32.totalorder %s13, 0
    %p159 = por %p157, %p158
    %p160 = scmp.ne.s32.totalorder %s152, %s154
    %p161 = scmp.eq.s32.totalorder %s18, 3
    %p162 = por %p160, %p161
    %p163 = scmp.ne.s32.totalorder %s154, %s155
    %p164 = scmp.eq.s32.totalorder %s18, 0
    %p165 = por %p163, %p164
    %p166 = scmp.ne.s32.totalorder %s154, %s155
    %p167 = scmp.eq.s32.totalorder %s19, 3
    %p168 = por %p166, %p167
    %p170 = scmp.ne.s32.totalorder %s155, %s169
    %p171 = scmp.eq.s32.totalorder %s19, 0
    %p172 = por %p170, %p171
    %s173 = ssub.s32 %s13, %s20
    %p174 = scmp.eq.s32.totalorder %s173, 0
    %s176 = sadd.s32 %s175, 1
    %s177 = scalar_select %p174, %s175, %s176
    %p180 = pneg %p174
    %p181 = scmp.eq.s32.totalorder %s13, 3
    %p182 = por %p180, %p181
    %p183 = scmp.ne.s32.totalorder %s175, %s178
    %p184 = scmp.eq.s32.totalorder %s13, 0
    %p185 = por %p183, %p184
    %p186 = scmp.ne.s32.totalorder %s175, %s178
    %p187 = scmp.eq.s32.totalorder %s18, 3
    %p188 = por %p186, %p187
    %p189 = scmp.ne.s32.totalorder %s178, %s179
    %p190 = scmp.eq.s32.totalorder %s18, 0
    %p191 = por %p189, %p190
    %p192 = scmp.ne.s32.totalorder %s178, %s179
    %p193 = scmp.eq.s32.totalorder %s19, 3
    %p194 = por %p192, %p193
    %p196 = scmp.ne.s32.totalorder %s179, %s195
    %p197 = scmp.eq.s32.totalorder %s19, 0
    %p198 = por %p196, %p197
    %p199 = scmp.le.s32.totalorder 1, %s13
    %p200 = scmp.lt.s32.totalorder %s13, 5
    %p201 = pnand %p199, %p200
    %p202 = pneg %p201
    // Predicated region
    $region9: #{tpu_custom_call.1} parent=5 // pred_check
      _
    $region10: #{tpu_custom_call.1} parent=5 // pred_check_branch
      %204 = sbr.rel (%p201) target = $region12
    $region11: #{tpu_custom_call.1} parent=5 // pred_region
      %s205 = ssub.s32 %s13, 1
      // Predicated region
      $region13: #{tpu_custom_call.1} parent=11 // pred_check
        %p206 = pneg %p60
      $region14: #{tpu_custom_call.1} parent=11 // pred_check_branch
        %208 = sbr.rel (%p206) target = $region16
      $region15: #{tpu_custom_call.1} parent=11 // pred_region
        _
      $region16: #{tpu_custom_call.1} parent=11 // pred_fallthru
        _
      // Predicated region
      $region17: #{tpu_custom_call.1} parent=11 // pred_check
        %p209 = pneg %p81
      $region18: #{tpu_custom_call.1} parent=11 // pred_check_branch
        %211 = sbr.rel (%p209) target = $region20
      $region19: #{tpu_custom_call.1} parent=11 // pred_region
        _
      $region20: #{tpu_custom_call.1} parent=11 // pred_fallthru
        _
      // Predicated region
      $region21: #{tpu_custom_call.1} parent=11 // pred_check
        %p212 = pneg %p102
      $region22: #{tpu_custom_call.1} parent=11 // pred_check_branch
        %214 = sbr.rel (%p212) target = $region24
      $region23: #{tpu_custom_call.1} parent=11 // pred_region
        _
      $region24: #{tpu_custom_call.1} parent=11 // pred_fallthru
        _
      // Predicated region
      $region25: #{tpu_custom_call.1} parent=11 // pred_check
        %p215 = pneg %p123
      $region26: #{tpu_custom_call.1} parent=11 // pred_check_branch
        %217 = sbr.rel (%p215) target = $region28
      $region27: #{tpu_custom_call.1} parent=11 // pred_region
        _
      $region28: #{tpu_custom_call.1} parent=11 // pred_fallthru
        _
      // Predicated region
      $region29: #{tpu_custom_call.1} parent=11 // pred_check
        %p218 = pneg %p144
      $region30: #{tpu_custom_call.1} parent=11 // pred_check_branch
        %220 = sbr.rel (%p218) target = $region32
      $region31: #{tpu_custom_call.1} parent=11 // pred_region
        _
      $region32: #{tpu_custom_call.1} parent=11 // pred_fallthru
        _
      // Predicated region
      $region33: #{tpu_custom_call.1} parent=11 // pred_check
        %p221 = pneg %p165
      $region34: #{tpu_custom_call.1} parent=11 // pred_check_branch
        %223 = sbr.rel (%p221) target = $region36
      $region35: #{tpu_custom_call.1} parent=11 // pred_region
        _
      $region36: #{tpu_custom_call.1} parent=11 // pred_fallthru
        _
    $region12: #{tpu_custom_call.1} parent=5 // pred_fallthru
      _
    %p224 = scmp.lt.s32.totalorder %s13, 4
    // Predicated region
    $region37: #{tpu_custom_call.1} parent=5 // pred_check
      %p225 = pneg %p224
    $region38: #{tpu_custom_call.1} parent=5 // pred_check_branch
      %227 = sbr.rel (%p225) target = $region40
    $region39: #{tpu_custom_call.1} parent=5 // pred_region
      // Predicated region
      $region41: #{tpu_custom_call.1} parent=39 // pred_check
        %p228 = pneg %p33
      $region42: #{tpu_custom_call.1} parent=39 // pred_check_branch
        %230 = sbr.rel (%p228) target = $region44
      $region43: #{tpu_custom_call.1} parent=39 // pred_region
        %s231 = smul.u32 8, %s13
        %p232 = scmp.lt.s32.totalorder %s231, 31
        %s233 = scalar_select %p232, %s231, 31
        %s234 = smul.addr %s233, 8
        %s235 = scalar_lea.vmem %s0, %s234
        %s236 = smul.u32 8, %s13
      $region44: #{tpu_custom_call.1} parent=39 // pred_fallthru
        _
    $region40: #{tpu_custom_call.1} parent=5 // pred_fallthru
      _
    %p237 = scmp.le.s32.totalorder 1, %s13
    %p238 = scmp.lt.s32.totalorder %s13, 5
    %p239 = pnand %p237, %p238
    %p240 = pneg %p239
    // Predicated region
    $region45: #{tpu_custom_call.1} parent=5 // pred_check
      _
    $region46: #{tpu_custom_call.1} parent=5 // pred_check_branch
      %242 = sbr.rel (%p239) target = $region48
    $region47: #{tpu_custom_call.1} parent=5 // pred_region
      %s243 = ssub.s32 %s13, 1
      %s244 = smul.u32 8, %s18
      %p245 = scmp.lt.s32.totalorder %s244, 31
      %s246 = scalar_select %p245, %s244, 31
      %s247 = smul.addr %s246, 8
      %s248 = scalar_lea.vmem %s0, %s247
      %p249 = pneg %p39
      %p250 = pneg %p36
      %p251 = pneg %p60
      %p252 = pneg %p57
      %p253 = pneg %p81
      %p254 = pneg %p78
      %p255 = pneg %p102
      %p256 = pneg %p99
      %p257 = pneg %p123
      %p258 = pneg %p120
      %p259 = pneg %p144
      %p260 = pneg %p141
      %p261 = pneg %p165
      %p262 = pneg %p162
      %p263 = pneg %p191
      %p264 = pneg %p188
      %s265 = smul.u32 8, %s18
      %p266 = scmp.lt.s32.totalorder %s265, 31
      %s267 = scalar_select %p266, %s265, 31
      %s268 = smul.addr %s267, 8
      %s269 = scalar_lea.vmem %s7, %s268
      %s270 = smul.u32 8, %s18
      %p271 = scmp.lt.s32.totalorder %s270, 31
      %s272 = scalar_select %p271, %s270, 31
      %s273 = smul.addr %s272, 8
      %s274 = scalar_lea.vmem %s0, %s273
      %s275 = smul.u32 8, %s18
      %s276 = smul.u32 8, %s18
      %p277 = scmp.lt.s32.totalorder %s276, 31
      %s278 = scalar_select %p277, %s276, 31
      %s279 = smul.addr %s278, 8
      %s280 = scalar_lea.vmem %s7, %s279
      %s281 = smul.u32 8, %s18
      %v282 = vld [vmem:[%s274] sm:$0xff]
      %v283 = vld [vmem:[%s274 + $0x8] sm:$0xff]
      %v284 = vld [vmem:[%s274 + $0x10] sm:$0xff]
      %v285 = vld [vmem:[%s274 + $0x18] sm:$0xff]
      %v286 = vld [vmem:[%s274 + $0x20] sm:$0xff]
      %v287 = vld [vmem:[%s274 + $0x28] sm:$0xff]
      %v288 = vld [vmem:[%s274 + $0x30] sm:$0xff]
      %v289 = vld [vmem:[%s274 + $0x38] sm:$0xff]
      %v290 = vld [vmem:[%s1] sm:$0xff]
      %v291 = vld [vmem:[%s1 + $0x8] sm:$0x3]
      %v292 = vld [vmem:[%s2] sm:$0x1]
      %v294 = vlaneseq
      %v295 = vshrl.u32 %v294, 7
      %v296 = vsub.s32 0, %v295
      %v297 = vrot.slane %v292, %v296
      %vm299 = vcmask 80896
      %v301 = vsel %vm299, %v282, 0
      %v304 = vsel %vm299, %v283, 0
      %v307 = vsel %vm299, %v284, 0
      %v310 = vsel %vm299, %v285, 0
      %v313 = vsel %vm299, %v286, 0
      %v316 = vsel %vm299, %v287, 0
      %v319 = vsel %vm299, %v288, 0
      %v322 = vsel %vm299, %v289, 0
      %vm324 = vcmask 1041408
      %v326 = vsel %vm324, %v291, 0
      %328 = vmatprep.subr.mxu0 0.0
      %329 = vmatpush1.msra.mxu0 %v290
      %330 = vmatprep.subr.mxu0 0.0
      %331 = vmatpush1.msra.mxu0 %v326
      %332 = vmatprep.subr.mxu0 0.0
      %333 = vmatpush1.msra.mxu0 0.0
      %334 = vmatprep.subr.mxu0 0.0
      %335 = vmatpush1.msra.mxu0 0.0
      %336 = vmatprep.subr.mxu0 0.0
      %337 = vmatpush1.msra.mxu0 0.0
      %338 = vmatprep.subr.mxu0 0.0
      %339 = vmatpush1.msra.mxu0 0.0
      %340 = vmatprep.subr.mxu0 0.0
      %341 = vmatpush1.msra.mxu0 0.0
      %342 = vmatprep.subr.mxu0 0.0
      %343 = vmatpush1.msra.mxu0 0.0
      %344 = vmatprep.subr.mxu0 0.0
      %345 = vmatpush1.msra.mxu0 0.0
      %346 = vmatprep.subr.mxu0 0.0
      %347 = vmatpush1.msra.mxu0 0.0
      %348 = vmatprep.subr.mxu0 0.0
      %349 = vmatpush1.msra.mxu0 0.0
      %350 = vmatprep.subr.mxu0 0.0
      %351 = vmatpush1.msra.mxu0 0.0
      %352 = vmatprep.subr.mxu0 0.0
      %353 = vmatpush1.msra.mxu0 0.0
      %354 = vmatprep.subr.mxu0 0.0
      %355 = vmatpush1.msra.mxu0 0.0
      %356 = vmatprep.subr.mxu0 0.0
      %357 = vmatpush1.msra.mxu0 0.0
      %358 = vmatprep.subr.mxu0 0.0
      %359 = vmatpush1.msra.mxu0 0.0
      %360 = vmatprep.subr.mxu0 0.0
      %361 = vmatpush1.msra.mxu0 0.0
      %362 = vmatprep.subr.mxu0 0.0
      %363 = vmatpush1.msra.mxu0 0.0
      %364 = vmatprep.subr.mxu0 0.0
      %365 = vmatpush1.msra.mxu0 0.0
      %366 = vmatprep.subr.mxu0 0.0
      %367 = vmatpush1.msra.mxu0 0.0
      %368 = vmatprep.subr.mxu0 0.0
      %369 = vmatpush1.msra.mxu0 0.0
      %370 = vmatprep.subr.mxu0 0.0
      %371 = vmatpush1.msra.mxu0 0.0
      %372 = vmatprep.subr.mxu0 0.0
      %373 = vmatpush1.msra.mxu0 0.0
      %374 = vmatprep.subr.mxu0 0.0
      %375 = vmatpush1.msra.mxu0 0.0
      %376 = vmatprep.subr.mxu0 0.0
      %377 = vmatpush1.msra.mxu0 0.0
      %378 = vmatprep.subr.mxu0 0.0
      %379 = vmatpush1.msra.mxu0 0.0
      %380 = vmatprep.subr.mxu0 0.0
      %381 = vmatpush1.msra.mxu0 0.0
      %382 = vmatprep.subr.mxu0 0.0
      %383 = vmatpush1.msra.mxu0 0.0
      %384 = vmatprep.subr.mxu0 0.0
      %385 = vmatpush1.msra.mxu0 0.0
      %386 = vmatprep.subr.mxu0 0.0
      %387 = vmatpush1.msra.mxu0 0.0
      %388 = vmatprep.subr.mxu0 0.0
      %389 = vmatpush1.msra.mxu0 0.0
      %390 = vmatprep.subr.mxu0 0.0
      %391 = vmatpush1.msra.mxu0 0.0
      %392 = vmatprep.mubr.f32.mxu0 0.0
      %393 = vmatmul.mubr.f32.gmra.mrb[0].mxu0 %v301
      %v394 = vpop.f32.mrb[0].mxu0
      %v395 = vadd.f32 %v297, %v394
      %v396 = vpop.f32.mrb[0].mxu0
      %397 = vmatprep.mubr.f32.mxu0 0.0
      %398 = vmatmul.mubr.f32.gmra.mrb[0].mxu0 %v304
      %v399 = vpop.f32.mrb[0].mxu0
      %v400 = vadd.f32 %v297, %v399
      %v401 = vpop.f32.mrb[0].mxu0
      %402 = vmatprep.mubr.f32.mxu0 0.0
      %403 = vmatmul.mubr.f32.gmra.mrb[0].mxu0 %v307
      %v404 = vpop.f32.mrb[0].mxu0
      %v405 = vadd.f32 %v297, %v404
      %v406 = vpop.f32.mrb[0].mxu0
      %407 = vmatprep.mubr.f32.mxu0 0.0
      %408 = vmatmul.mubr.f32.gmra.mrb[0].mxu0 %v310
      %v409 = vpop.f32.mrb[0].mxu0
      %v410 = vadd.f32 %v297, %v409
      %v411 = vpop.f32.mrb[0].mxu0
      %412 = vmatprep.mubr.f32.mxu0 0.0
      %413 = vmatmul.mubr.f32.gmra.mrb[0].mxu0 %v313
      %v414 = vpop.f32.mrb[0].mxu0
      %v415 = vadd.f32 %v297, %v414
      %v416 = vpop.f32.mrb[0].mxu0
      %417 = vmatprep.mubr.f32.mxu0 0.0
      %418 = vmatmul.mubr.f32.gmra.mrb[0].mxu0 %v316
      %v419 = vpop.f32.mrb[0].mxu0
      %v420 = vadd.f32 %v297, %v419
      %v421 = vpop.f32.mrb[0].mxu0
      %422 = vmatprep.mubr.f32.mxu0 0.0
      %423 = vmatmul.mubr.f32.gmra.mrb[0].mxu0 %v319
      %v424 = vpop.f32.mrb[0].mxu0
      %v425 = vadd.f32 %v297, %v424
      %v426 = vpop.f32.mrb[0].mxu0
      %427 = vmatprep.mubr.f32.mxu0 0.0
      %428 = vmatmul.mubr.f32.gmra.mrb[0].mxu0 %v322
      %v429 = vpop.f32.mrb[0].mxu0
      %v430 = vadd.f32 %v297, %v429
      %v431 = vpop.f32.mrb[0].mxu0
      %432 = vdwg.mxu0
      %v433 = vmax.f32 %v395, 0.0
      %v434 = vmax.f32 %v400, 0.0
      %v435 = vmax.f32 %v405, 0.0
      %v436 = vmax.f32 %v410, 0.0
      %v437 = vmax.f32 %v415, 0.0
      %v438 = vmax.f32 %v420, 0.0
      %v439 = vmax.f32 %v425, 0.0
      %v440 = vmax.f32 %v430, 0.0
      %v441 = vld [vmem:[%s3] sm:$0xff]
      %v442 = vld [vmem:[%s3 + $0x8] sm:$0xff]
      %v443 = vld [vmem:[%s3 + $0x10] sm:$0xff]
      %v444 = vld [vmem:[%s3 + $0x18] sm:$0xff]
      %v445 = vld [vmem:[%s4] sm:$0x1]
      %v447 = vlaneseq
      %v448 = vshrl.u32 %v447, 7
      %v449 = vsub.s32 0, %v448
      %v450 = vrot.slane %v445, %v449
      %vm452 = vcmask 261120
      %v454 = vsel %vm452, %v433, 0
      %v457 = vsel %vm452, %v434, 0
      %v460 = vsel %vm452, %v435, 0
      %v463 = vsel %vm452, %v436, 0
      %v466 = vsel %vm452, %v437, 0
      %v469 = vsel %vm452, %v438, 0
      %v472 = vsel %vm452, %v439, 0
      %v475 = vsel %vm452, %v440, 0
      %477 = vmatprep.subr.mxu0 0.0
      %478 = vmatpush1.msra.mxu0 %v441
      %479 = vmatprep.subr.mxu0 0.0
      %480 = vmatpush1.msra.mxu0 %v442
      %481 = vmatprep.subr.mxu0 0.0
      %482 = vmatpush1.msra.mxu0 %v443
      %483 = vmatprep.subr.mxu0 0.0
      %484 = vmatpush1.msra.mxu0 %v444
      %485 = vmatprep.subr.mxu0 0.0
      %486 = vmatpush1.msra.mxu0 0.0
      %487 = vmatprep.subr.mxu0 0.0
      %488 = vmatpush1.msra.mxu0 0.0
      %489 = vmatprep.subr.mxu0 0.0
      %490 = vmatpush1.msra.mxu0 0.0
      %491 = vmatprep.subr.mxu0 0.0
      %492 = vmatpush1.msra.mxu0 0.0
      %493 = vmatprep.subr.mxu0 0.0
      %494 = vmatpush1.msra.mxu0 0.0
      %495 = vmatprep.subr.mxu0 0.0
      %496 = vmatpush1.msra.mxu0 0.0
      %497 = vmatprep.subr.mxu0 0.0
      %498 = vmatpush1.msra.mxu0 0.0
      %499 = vmatprep.subr.mxu0 0.0
      %500 = vmatpush1.msra.mxu0 0.0
      %501 = vmatprep.subr.mxu0 0.0
      %502 = vmatpush1.msra.mxu0 0.0
      %503 = vmatprep.subr.mxu0 0.0
      %504 = vmatpush1.msra.mxu0 0.0
      %505 = vmatprep.subr.mxu0 0.0
      %506 = vmatpush1.msra.mxu0 0.0
      %507 = vmatprep.subr.mxu0 0.0
      %508 = vmatpush1.msra.mxu0 0.0
      %509 = vmatprep.subr.mxu0 0.0
      %510 = vmatpush1.msra.mxu0 0.0
      %511 = vmatprep.subr.mxu0 0.0
      %512 = vmatpush1.msra.mxu0 0.0
      %513 = vmatprep.subr.mxu0 0.0
      %514 = vmatpush1.msra.mxu0 0.0
      %515 = vmatprep.subr.mxu0 0.0
      %516 = vmatpush1.msra.mxu0 0.0
      %517 = vmatprep.subr.mxu0 0.0
      %518 = vmatpush1.msra.mxu0 0.0
      %519 = vmatprep.subr.mxu0 0.0
      %520 = vmatpush1.msra.mxu0 0.0
      %521 = vmatprep.subr.mxu0 0.0
      %522 = vmatpush1.msra.mxu0 0.0
      %523 = vmatprep.subr.mxu0 0.0
      %524 = vmatpush1.msra.mxu0 0.0
      %525 = vmatprep.subr.mxu0 0.0
      %526 = vmatpush1.msra.mxu0 0.0
      %527 = vmatprep.subr.mxu0 0.0
      %528 = vmatpush1.msra.mxu0 0.0
      %529 = vmatprep.subr.mxu0 0.0
      %530 = vmatpush1.msra.mxu0 0.0
      %531 = vmatprep.subr.mxu0 0.0
      %532 = vmatpush1.msra.mxu0 0.0
      %533 = vmatprep.subr.mxu0 0.0
      %534 = vmatpush1.msra.mxu0 0.0
      %535 = vmatprep.subr.mxu0 0.0
      %536 = vmatpush1.msra.mxu0 0.0
      %537 = vmatprep.subr.mxu0 0.0
      %538 = vmatpush1.msra.mxu0 0.0
      %539 = vmatprep.subr.mxu0 0.0
      %540 = vmatpush1.msra.mxu0 0.0
      %541 = vmatprep.mubr.f32.mxu0 0.0
      %542 = vmatmul.mubr.f32.gmra.mrb[0].mxu0 %v454
      %v543 = vpop.f32.mrb[0].mxu0
      %v544 = vadd.f32 %v450, %v543
      %v545 = vpop.f32.mrb[0].mxu0
      %546 = vmatprep.mubr.f32.mxu0 0.0
      %547 = vmatmul.mubr.f32.gmra.mrb[0].mxu0 %v457
      %v548 = vpop.f32.mrb[0].mxu0
      %v549 = vadd.f32 %v450, %v548
      %v550 = vpop.f32.mrb[0].mxu0
      %551 = vmatprep.mubr.f32.mxu0 0.0
      %552 = vmatmul.mubr.f32.gmra.mrb[0].mxu0 %v460
      %v553 = vpop.f32.mrb[0].mxu0
      %v554 = vadd.f32 %v450, %v553
      %v555 = vpop.f32.mrb[0].mxu0
      %556 = vmatprep.mubr.f32.mxu0 0.0
      %557 = vmatmul.mubr.f32.gmra.mrb[0].mxu0 %v463
      %v558 = vpop.f32.mrb[0].mxu0
      %v559 = vadd.f32 %v450, %v558
      %v560 = vpop.f32.mrb[0].mxu0
      %561 = vmatprep.mubr.f32.mxu0 0.0
      %562 = vmatmul.mubr.f32.gmra.mrb[0].mxu0 %v466
      %v563 = vpop.f32.mrb[0].mxu0
      %v564 = vadd.f32 %v450, %v563
      %v565 = vpop.f32.mrb[0].mxu0
      %566 = vmatprep.mubr.f32.mxu0 0.0
      %567 = vmatmul.mubr.f32.gmra.mrb[0].mxu0 %v469
      %v568 = vpop.f32.mrb[0].mxu0
      %v569 = vadd.f32 %v450, %v568
      %v570 = vpop.f32.mrb[0].mxu0
      %571 = vmatprep.mubr.f32.mxu0 0.0
      %572 = vmatmul.mubr.f32.gmra.mrb[0].mxu0 %v472
      %v573 = vpop.f32.mrb[0].mxu0
      %v574 = vadd.f32 %v450, %v573
      %v575 = vpop.f32.mrb[0].mxu0
      %576 = vmatprep.mubr.f32.mxu0 0.0
      %577 = vmatmul.mubr.f32.gmra.mrb[0].mxu0 %v475
      %v578 = vpop.f32.mrb[0].mxu0
      %v579 = vadd.f32 %v450, %v578
      %v580 = vpop.f32.mrb[0].mxu0
      %581 = vdwg.mxu0
      %v582 = vmax.f32 %v544, 0.0
      %v583 = vmax.f32 %v549, 0.0
      %v584 = vmax.f32 %v554, 0.0
      %v585 = vmax.f32 %v559, 0.0
      %v586 = vmax.f32 %v564, 0.0
      %v587 = vmax.f32 %v569, 0.0
      %v588 = vmax.f32 %v574, 0.0
      %v589 = vmax.f32 %v579, 0.0
      %v590 = vld [vmem:[%s5] sm:$0xff]
      %v591 = vld [vmem:[%s5 + $0x8] sm:$0xff]
      %v592 = vld [vmem:[%s5 + $0x10] sm:$0xff]
      %v593 = vld [vmem:[%s5 + $0x18] sm:$0xff]
      %v594 = vld [vmem:[%s6] sm:$0x1]
      %v596 = vlaneseq
      %v597 = vshrl.u32 %v596, 7
      %v598 = vsub.s32 0, %v597
      %v599 = vrot.slane %v594, %v598
      %v602 = vsel %vm452, %v582, 0
      %v605 = vsel %vm452, %v583, 0
      %v608 = vsel %vm452, %v584, 0
      %v611 = vsel %vm452, %v585, 0
      %v614 = vsel %vm452, %v586, 0
      %v617 = vsel %vm452, %v587, 0
      %v620 = vsel %vm452, %v588, 0
      %v623 = vsel %vm452, %v589, 0
      %625 = vmatprep.subr.mxu0 0.0
      %626 = vmatpush1.msra.mxu0 %v590
      %627 = vmatprep.subr.mxu0 0.0
      %628 = vmatpush1.msra.mxu0 %v591
      %629 = vmatprep.subr.mxu0 0.0
      %630 = vmatpush1.msra.mxu0 %v592
      %631 = vmatprep.subr.mxu0 0.0
      %632 = vmatpush1.msra.mxu0 %v593
      %633 = vmatprep.subr.mxu0 0.0
      %634 = vmatpush1.msra.mxu0 0.0
      %635 = vmatprep.subr.mxu0 0.0
      %636 = vmatpush1.msra.mxu0 0.0
      %637 = vmatprep.subr.mxu0 0.0
      %638 = vmatpush1.msra.mxu0 0.0
      %639 = vmatprep.subr.mxu0 0.0
      %640 = vmatpush1.msra.mxu0 0.0
      %641 = vmatprep.subr.mxu0 0.0
      %642 = vmatpush1.msra.mxu0 0.0
      %643 = vmatprep.subr.mxu0 0.0
      %644 = vmatpush1.msra.mxu0 0.0
      %645 = vmatprep.subr.mxu0 0.0
      %646 = vmatpush1.msra.mxu0 0.0
      %647 = vmatprep.subr.mxu0 0.0
      %648 = vmatpush1.msra.mxu0 0.0
      %649 = vmatprep.subr.mxu0 0.0
      %650 = vmatpush1.msra.mxu0 0.0
      %651 = vmatprep.subr.mxu0 0.0
      %652 = vmatpush1.msra.mxu0 0.0
      %653 = vmatprep.subr.mxu0 0.0
      %654 = vmatpush1.msra.mxu0 0.0
      %655 = vmatprep.subr.mxu0 0.0
      %656 = vmatpush1.msra.mxu0 0.0
      %657 = vmatprep.subr.mxu0 0.0
      %658 = vmatpush1.msra.mxu0 0.0
      %659 = vmatprep.subr.mxu0 0.0
      %660 = vmatpush1.msra.mxu0 0.0
      %661 = vmatprep.subr.mxu0 0.0
      %662 = vmatpush1.msra.mxu0 0.0
      %663 = vmatprep.subr.mxu0 0.0
      %664 = vmatpush1.msra.mxu0 0.0
      %665 = vmatprep.subr.mxu0 0.0
      %666 = vmatpush1.msra.mxu0 0.0
      %667 = vmatprep.subr.mxu0 0.0
      %668 = vmatpush1.msra.mxu0 0.0
      %669 = vmatprep.subr.mxu0 0.0
      %670 = vmatpush1.msra.mxu0 0.0
      %671 = vmatprep.subr.mxu0 0.0
      %672 = vmatpush1.msra.mxu0 0.0
      %673 = vmatprep.subr.mxu0 0.0
      %674 = vmatpush1.msra.mxu0 0.0
      %675 = vmatprep.subr.mxu0 0.0
      %676 = vmatpush1.msra.mxu0 0.0
      %677 = vmatprep.subr.mxu0 0.0
      %678 = vmatpush1.msra.mxu0 0.0
      %679 = vmatprep.subr.mxu0 0.0
      %680 = vmatpush1.msra.mxu0 0.0
      %681 = vmatprep.subr.mxu0 0.0
      %682 = vmatpush1.msra.mxu0 0.0
      %683 = vmatprep.subr.mxu0 0.0
      %684 = vmatpush1.msra.mxu0 0.0
      %685 = vmatprep.subr.mxu0 0.0
      %686 = vmatpush1.msra.mxu0 0.0
      %687 = vmatprep.subr.mxu0 0.0
      %688 = vmatpush1.msra.mxu0 0.0
      %689 = vmatprep.mubr.f32.mxu0 0.0
      %690 = vmatmul.mubr.f32.gmra.mrb[0].mxu0 %v602
      %v691 = vpop.f32.mrb[0].mxu0
      %v692 = vadd.f32 %v599, %v691
      %v693 = vpop.f32.mrb[0].mxu0
      %694 = vmatprep.mubr.f32.mxu0 0.0
      %695 = vmatmul.mubr.f32.gmra.mrb[0].mxu0 %v605
      %v696 = vpop.f32.mrb[0].mxu0
      %v697 = vadd.f32 %v599, %v696
      %v698 = vpop.f32.mrb[0].mxu0
      %699 = vmatprep.mubr.f32.mxu0 0.0
      %700 = vmatmul.mubr.f32.gmra.mrb[0].mxu0 %v608
      %v701 = vpop.f32.mrb[0].mxu0
      %v702 = vadd.f32 %v599, %v701
      %v703 = vpop.f32.mrb[0].mxu0
      %704 = vmatprep.mubr.f32.mxu0 0.0
      %705 = vmatmul.mubr.f32.gmra.mrb[0].mxu0 %v611
      %v706 = vpop.f32.mrb[0].mxu0
      %v707 = vadd.f32 %v599, %v706
      %v708 = vpop.f32.mrb[0].mxu0
      %709 = vmatprep.mubr.f32.mxu0 0.0
      %710 = vmatmul.mubr.f32.gmra.mrb[0].mxu0 %v614
      %v711 = vpop.f32.mrb[0].mxu0
      %v712 = vadd.f32 %v599, %v711
      %v713 = vpop.f32.mrb[0].mxu0
      %714 = vmatprep.mubr.f32.mxu0 0.0
      %715 = vmatmul.mubr.f32.gmra.mrb[0].mxu0 %v617
      %v716 = vpop.f32.mrb[0].mxu0
      %v717 = vadd.f32 %v599, %v716
      %v718 = vpop.f32.mrb[0].mxu0
      %719 = vmatprep.mubr.f32.mxu0 0.0
      %720 = vmatmul.mubr.f32.gmra.mrb[0].mxu0 %v620
      %v721 = vpop.f32.mrb[0].mxu0
      %v722 = vadd.f32 %v599, %v721
      %v723 = vpop.f32.mrb[0].mxu0
      %724 = vmatprep.mubr.f32.mxu0 0.0
      %725 = vmatmul.mubr.f32.gmra.mrb[0].mxu0 %v623
      %v726 = vpop.f32.mrb[0].mxu0
      %v727 = vadd.f32 %v599, %v726
      %v728 = vpop.f32.mrb[0].mxu0
      %729 = vdwg.mxu0
      %vm730 = vcmask 15360
      %731 = vst.msk [vmem:[%s280] sm:$0xff] %vm730, %v692
      %732 = vst.msk [vmem:[%s280 + $0x8] sm:$0xff] %vm730, %v697
      %733 = vst.msk [vmem:[%s280 + $0x10] sm:$0xff] %vm730, %v702
      %734 = vst.msk [vmem:[%s280 + $0x18] sm:$0xff] %vm730, %v707
      %735 = vst.msk [vmem:[%s280 + $0x20] sm:$0xff] %vm730, %v712
      %736 = vst.msk [vmem:[%s280 + $0x28] sm:$0xff] %vm730, %v717
      %737 = vst.msk [vmem:[%s280 + $0x30] sm:$0xff] %vm730, %v722
      %738 = vst.msk [vmem:[%s280 + $0x38] sm:$0xff] %vm730, %v727
      %s739 = smul.u32 8, %s18
      %p740 = scmp.lt.s32.totalorder %s739, 31
      %s741 = scalar_select %p740, %s739, 31
      %s742 = smul.addr %s741, 8
      %s743 = scalar_lea.vmem %s7, %s742
      // Predicated region
      $region49: #{tpu_custom_call.1} parent=47 // pred_check
        %p744 = pneg %p188
      $region50: #{tpu_custom_call.1} parent=47 // pred_check_branch
        %746 = sbr.rel (%p744) target = $region52
      $region51: #{tpu_custom_call.1} parent=47 // pred_region
        %s747 = smul.u32 8, %s18
      $region52: #{tpu_custom_call.1} parent=47 // pred_fallthru
        _
    $region48: #{tpu_custom_call.1} parent=5 // pred_fallthru
      _
    %p748 = scmp.le.s32.totalorder 2, %s13
    // Predicated region
    $region53: #{tpu_custom_call.1} parent=5 // pred_check
      %p749 = pneg %p748
    $region54: #{tpu_custom_call.1} parent=5 // pred_check_branch
      %751 = sbr.rel (%p749) target = $region56
    $region55: #{tpu_custom_call.1} parent=5 // pred_region
      %s752 = ssub.s32 %s13, 2
      // Predicated region
      $region57: #{tpu_custom_call.1} parent=55 // pred_check
        %p753 = pneg %p194
      $region58: #{tpu_custom_call.1} parent=55 // pred_check_branch
        %755 = sbr.rel (%p753) target = $region60
      $region59: #{tpu_custom_call.1} parent=55 // pred_region
        %s756 = smul.u32 8, %s19
        %p757 = scmp.lt.s32.totalorder %s756, 31
        %s758 = scalar_select %p757, %s756, 31
        %s759 = smul.addr %s758, 8
        %s760 = scalar_lea.vmem %s7, %s759
      $region60: #{tpu_custom_call.1} parent=55 // pred_fallthru
        _
    $region56: #{tpu_custom_call.1} parent=5 // pred_fallthru
      _
  $region6: #{tpu_custom_call.1} parent=0 // loop_footer
    %s17 = sadd.s32 1, %s13
  $region7: #{tpu_custom_call.1} parent=0 // loop_footer_branch
    %12 = sbr.rel target = $region3
  $region8: #{tpu_custom_call.1} parent=0 // loop_exit
    _

</llo_original>
